<compile_context>
chip_gen: v5e
topology: v5e:2x2
jax: 0.10.0
libtpu: 0.0.40
codegen_flags: <defaults>
</compile_context>

<pallas_src>
import jax
import jax.numpy as jnp
from jax.experimental import pallas as pl
from jax.experimental.pallas import tpu as pltpu

EPS = 1e-5  # torch.nn.LayerNorm default


def _cnn_layernorm_kernel(x_ref, gamma_ref, beta_ref, o_ref):
    # x_ref: (bc_tile, F, t_tile).  Normalize each (bc, :, t) column over F
    # (axis=-2), i.e. over n_feats in the original NCHW-ish layout, so the
    # wrapper needs no transposes.  Reduction over the sublane axis is cheap
    # VPU adds across vregs + a small XLU reduce; kernel is HBM-bound anyway.
    x = x_ref[...].astype(jnp.float32)
    mean = jnp.mean(x, axis=-2, keepdims=True)                 # (bc, 1, t)
    centered = x - mean
    var = jnp.mean(centered * centered, axis=-2, keepdims=True)
    inv = jax.lax.rsqrt(var + EPS)
    g = gamma_ref[...].astype(jnp.float32)                     # (F, 1) -> broadcast over lanes
    b = beta_ref[...].astype(jnp.float32)
    o_ref[...] = (centered * inv * g + b).astype(o_ref.dtype)


def cnn_layer_norm(x, gamma, beta, *, bc_tile=None, t_tile=None):
    """Exact forward of CNNLayerNorm.

    x: (B, C, n_feats, T) -> same shape, normalized over n_feats per
    (batch, channel, time) position.  No transposes; only free leading-dim
    reshapes.
    """
    B, C, F, T = x.shape
    BC = B * C
    x3 = x.reshape(BC, F, T)  # free: only leading dims are merged

    # ---- tile sizing -------------------------------------------------------
    # Lane (last) axis: multiples of 128 for unmasked vector stores, or the
    # full extent when T is not a multiple of 128 (full-dim blocks are legal).
    if t_tile is None:
        t_tile = min(T, 512) if T % 128 == 0 else T
    # Leading axis: grow the block to ~2 MiB of input so the ~0.35 us per-step
    # overhead vanishes; 2 arrays (in+out) x 2 buffers x 2 MiB = 8 MiB fits the
    # v5e 16 MiB scoped-VMEM default and v7x's 64 MiB physical VMEM.
    if bc_tile is None:
        bytes_per_bc = F * t_tile * x.dtype.itemsize
        target_bytes = 2 * 1024 * 1024
        bc_tile = max(1, min(BC, target_bytes // max(1, bytes_per_bc)))
        # Keep >= 2 grid steps when possible so v7x's two TensorCores both get work.
        if bc_tile >= BC and pl.cdiv(T, t_tile) == 1 and BC > 1:
            bc_tile = pl.cdiv(BC, 2)

    grid = (pl.cdiv(BC, bc_tile), pl.cdiv(T, t_tile))  # cdiv: padded tail blocks OK

    gamma_col = gamma.reshape(F, 1)  # (F, 1): broadcasts over the lane (T) axis
    beta_col = beta.reshape(F, 1)

    y3 = pl.pallas_call(
        _cnn_layernorm_kernel,
        out_shape=jax.ShapeDtypeStruct((BC, F, T), x.dtype),
        grid_spec=pltpu.PrefetchScalarGridSpec(
            num_scalar_prefetch=0,
            grid=grid,
            in_specs=[
                pl.BlockSpec((bc_tile, F, t_tile), lambda i, j: (i, 0, j)),
                pl.BlockSpec((F, 1), lambda i, j: (0, 0)),
                pl.BlockSpec((F, 1), lambda i, j: (0, 0)),
            ],
            out_specs=pl.BlockSpec((bc_tile, F, t_tile), lambda i, j: (i, 0, j)),
        ),
        compiler_params=pltpu.CompilerParams(
            dimension_semantics=("parallel", "parallel")),
    )(x3, gamma_col, beta_col)

    return y3.reshape(B, C, F, T)


def _reference(x, gamma, beta):
    xt = jnp.transpose(x, (0, 1, 3, 2)).astype(jnp.float32)
    mean = jnp.mean(xt, axis=-1, keepdims=True)
    var = jnp.mean((xt - mean) ** 2, axis=-1, keepdims=True)
    y = (xt - mean) / jnp.sqrt(var + EPS) * gamma + beta
    return jnp.transpose(y, (0, 1, 3, 2)).astype(x.dtype)


if __name__ == "__main__":
    key = jax.random.PRNGKey(0)
    B, C, n_feats, T = 2, 4, 32, 16

    x = jax.random.normal(key, (B, C, n_feats, T), dtype=jnp.float32)

    # nn.LayerNorm(n_feats) parameter init: weight=1, bias=0 (deterministic).
    gamma = jnp.ones((n_feats,), dtype=jnp.float32)
    beta = jnp.zeros((n_feats,), dtype=jnp.float32)

    out = jax.block_until_ready(cnn_layer_norm(x, gamma, beta))
    ref = _reference(x, gamma, beta)
    assert out.shape == x.shape
    assert jnp.allclose(out, ref, atol=1e-5, rtol=1e-5), "mismatch vs reference"

    # Second check: ragged leading dim (B*C=3 with bc_tile=2 -> padded tail
    # block via cdiv grid) and non-trivial affine params.
    k1, k2, k3 = jax.random.split(jax.random.PRNGKey(1), 3)
    x2 = jax.random.normal(k1, (1, 3, n_feats, 48), dtype=jnp.float32)
    gamma2 = jax.random.normal(k2, (n_feats,), dtype=jnp.float32)
    beta2 = jax.random.normal(k3, (n_feats,), dtype=jnp.float32)
    out2 = jax.block_until_ready(
        cnn_layer_norm(x2, gamma2, beta2, bc_tile=2, t_tile=48))
    ref2 = _reference(x2, gamma2, beta2)
    assert jnp.allclose(out2, ref2, atol=1e-5, rtol=1e-5), "mismatch (ragged case)"

    print("KERNEL_OK")
</pallas_src>

<mosaic_0001>
module attributes {stable_mosaic.version = 11 : i64} {
  func.func @_cnn_layernorm_kernel(%arg0: i32, %arg1: i32, %arg2: memref<4x32x16xf32, #tpu.memory_space<vmem>>, %arg3: memref<32x1xf32, #tpu.memory_space<vmem>>, %arg4: memref<32x1xf32, #tpu.memory_space<vmem>>, %arg5: memref<4x32x16xf32, #tpu.memory_space<vmem>>) attributes {dimension_semantics = [#tpu.dimension_semantics<parallel>, #tpu.dimension_semantics<parallel>], iteration_bounds = array<i64: 2, 1>, scalar_prefetch = 0 : i64, scratch_operands = 0 : i64, tpu.core_type = #tpu.core_type<tc>, window_params = [{transform_indices = @transform_0, window_bounds = array<i64: 4, 32, 16>}, {pipeline_mode = #tpu.pipeline_mode<synchronous>, transform_indices = @transform_1, window_bounds = array<i64: 32, 1>}, {pipeline_mode = #tpu.pipeline_mode<synchronous>, transform_indices = @transform_2, window_bounds = array<i64: 32, 1>}, {transform_indices = @transform_3, window_bounds = array<i64: 4, 32, 16>}]} {
    %c0 = arith.constant 0 : index
    %c0_0 = arith.constant 0 : index
    %c0_1 = arith.constant 0 : index
    %0 = vector.load %arg2[%c0, %c0_0, %c0_1] : memref<4x32x16xf32, #tpu.memory_space<vmem>>, vector<4x32x16xf32>
    %cst = arith.constant dense<0.000000e+00> : vector<4x16xf32>
    %1 = vector.multi_reduction <add>, %0, %cst [1] : vector<4x32x16xf32> to vector<4x16xf32>
    %2 = vector.shape_cast %1 : vector<4x16xf32> to vector<4x1x16xf32>
    %cst_2 = arith.constant 3.200000e+01 : f32
    %3 = vector.broadcast %cst_2 : f32 to vector<4x1x16xf32>
    %4 = arith.divf %2, %3 : vector<4x1x16xf32>
    %5 = vector.broadcast %4 : vector<4x1x16xf32> to vector<4x32x16xf32>
    %6 = arith.subf %0, %5 : vector<4x32x16xf32>
    %7 = arith.mulf %6, %6 : vector<4x32x16xf32>
    %cst_3 = arith.constant dense<0.000000e+00> : vector<4x16xf32>
    %8 = vector.multi_reduction <add>, %7, %cst_3 [1] : vector<4x32x16xf32> to vector<4x16xf32>
    %9 = vector.shape_cast %8 : vector<4x16xf32> to vector<4x1x16xf32>
    %cst_4 = arith.constant 3.200000e+01 : f32
    %10 = vector.broadcast %cst_4 : f32 to vector<4x1x16xf32>
    %11 = arith.divf %9, %10 : vector<4x1x16xf32>
    %cst_5 = arith.constant 9.99999974E-6 : f32
    %12 = vector.broadcast %cst_5 : f32 to vector<4x1x16xf32>
    %13 = arith.addf %11, %12 : vector<4x1x16xf32>
    %14 = math.rsqrt %13 : vector<4x1x16xf32>
    %c0_6 = arith.constant 0 : index
    %c0_7 = arith.constant 0 : index
    %15 = vector.load %arg3[%c0_6, %c0_7] : memref<32x1xf32, #tpu.memory_space<vmem>>, vector<32x1xf32>
    %c0_8 = arith.constant 0 : index
    %c0_9 = arith.constant 0 : index
    %16 = vector.load %arg4[%c0_8, %c0_9] : memref<32x1xf32, #tpu.memory_space<vmem>>, vector<32x1xf32>
    %17 = vector.broadcast %14 : vector<4x1x16xf32> to vector<4x32x16xf32>
    %18 = arith.mulf %6, %17 : vector<4x32x16xf32>
    %19 = vector.shape_cast %15 : vector<32x1xf32> to vector<1x32x1xf32>
    %20 = vector.broadcast %19 : vector<1x32x1xf32> to vector<4x32x16xf32>
    %21 = arith.mulf %18, %20 : vector<4x32x16xf32>
    %22 = vector.shape_cast %16 : vector<32x1xf32> to vector<1x32x1xf32>
    %23 = vector.broadcast %22 : vector<1x32x1xf32> to vector<4x32x16xf32>
    %24 = arith.addf %21, %23 : vector<4x32x16xf32>
    %c0_10 = arith.constant 0 : index
    %c0_11 = arith.constant 0 : index
    %c0_12 = arith.constant 0 : index
    %25 = vector.load %arg5[%c0_10, %c0_11, %c0_12] : memref<4x32x16xf32, #tpu.memory_space<vmem>>, vector<4x32x16xf32>
    tpu.vector_store %arg5[%c0_10, %c0_11, %c0_12], %24 {strides = array<i32>} : memref<4x32x16xf32, #tpu.memory_space<vmem>>, vector<4x32x16xf32>,
    return
  }
  func.func @transform_0(%arg0: i32, %arg1: i32) -> (i32, i32, i32) {
    %c0_i32 = arith.constant 0 : i32
    %c0_i32_0 = arith.constant 0 : i32
    return %arg0, %c0_i32, %arg1 : i32, i32, i32
  }
  func.func @transform_1(%arg0: i32, %arg1: i32) -> (i32, i32) {
    %c0_i32 = arith.constant 0 : i32
    %c0_i32_0 = arith.constant 0 : i32
    %c0_i32_1 = arith.constant 0 : i32
    return %c0_i32, %c0_i32_0 : i32, i32
  }
  func.func @transform_2(%arg0: i32, %arg1: i32) -> (i32, i32) {
    %c0_i32 = arith.constant 0 : i32
    %c0_i32_0 = arith.constant 0 : i32
    %c0_i32_1 = arith.constant 0 : i32
    return %c0_i32, %c0_i32_0 : i32, i32
  }
  func.func @transform_3(%arg0: i32, %arg1: i32) -> (i32, i32, i32) {
    %c0_i32 = arith.constant 0 : i32
    %c0_i32_0 = arith.constant 0 : i32
    return %arg0, %c0_i32, %arg1 : i32, i32, i32
  }
}

</mosaic_0001>

<llo_original>
// kernel: tpu_custom_call.1
$region0: #{tpu_custom_call.1}
  #allocation0 [shape = 'u32[]', space=smem, size = 0x4, offset = 0x4, fixed_abs, tag = 'smem constant byte address 0x4 - core index']
  #allocation1 [shape = 'u32[72,128]{1,0:T(1,128)}', space=vmem, size = 0x9000, scoped, tag = 'internal scratch']
  %s0 = inlined_call_operand.vmem [shape: f32[8,32,16], index: 0, kind: input, shape index: {}]
  %s1 = inlined_call_operand.vmem [shape: f32[32,1], index: 1, kind: input, shape index: {}]
  %s2 = inlined_call_operand.vmem [shape: f32[32,1], index: 2, kind: input, shape index: {}]
  %s3 = inlined_call_operand.vmem [shape: f32[8,32,16], index: 3, kind: output, shape index: {}]
  %s4 = sld [smem:[#allocation0]]
  $region45: #{tpu_custom_call.1} parent=0
    _
  %s6 = ssub.s32 1, %s4
  %s7 = scalar_select 0, %s6, %s4
  loop: start=0, step=1, limit=4
  $region2: #{tpu_custom_call.1} parent=0 // loop_pre_header
    _
  $region3: #{tpu_custom_call.1} parent=0 // loop_header
    %s9 = sphi 0, %s13
    %p10 = scmp.ge.s32.totalorder %s9, 4
    %s16 = sphi 0, %s28
    %s17 = sphi 0, %s24
    %s18 = sphi 0, %s16
    %s19 = sphi 0, %s17
    %s20 = sphi 0, %s18
    %s21 = sphi 0, %s19
    %s33 = sphi 0, %s35
    %s36 = sphi 0, %s33
    %s37 = sphi 0, %s36
    %s53 = sphi 0, %s37
    %s57 = sphi 0, %s57
    %s59 = sphi 0, %s57
    %s60 = sphi 0, %s59
    %s74 = sphi 0, %s60
    %s78 = sphi 0, %s78
    %s80 = sphi 0, %s78
    %s81 = sphi 0, %s80
    %s95 = sphi 0, %s81
    %s103 = sphi 0, %s105
    %s106 = sphi 0, %s103
    %s107 = sphi 0, %s106
    %s123 = sphi 0, %s107
  $region4: #{tpu_custom_call.1} parent=0 // loop_header_branch
    %12 = sbr.rel (%p10) target = $region8
  $region5: #{tpu_custom_call.1} parent=0 // loop_body
    %s14 = ssub.s32 %s9, 1
    %s15 = ssub.s32 %s9, 2
    %s22 = sadd.s32 1, %s17
    %p23 = scmp.ge.s32.totalorder %s22, 1
    %s24 = scalar_select %p23, 0, %s22
    %s25 = sadd.s32 1, %s16
    %s26 = scalar_select %p23, %s25, %s16
    %p27 = scmp.ge.s32.totalorder %s26, 2
    %s28 = scalar_select %p27, 0, %s26
    %s29 = ssub.s32 %s16, %s28
    %s30 = ssub.s32 %s17, %s24
    %s31 = sor.u32 %s29, %s30
    %p32 = scmp.eq.s32.totalorder %s31, 0
    %s34 = sadd.s32 %s33, 1
    %s35 = scalar_select %p32, %s33, %s34
    %p38 = pneg %p32
    %p39 = scmp.eq.s32.totalorder %s9, 1
    %p40 = por %p38, %p39
    %p41 = scmp.ne.s32.totalorder %s33, %s36
    %p42 = scmp.eq.s32.totalorder %s9, 0
    %p43 = por %p41, %p42
    %p44 = scmp.ne.s32.totalorder %s33, %s36
    %p45 = scmp.eq.s32.totalorder %s14, 1
    %p46 = por %p44, %p45
    %p47 = scmp.ne.s32.totalorder %s36, %s37
    %p48 = scmp.eq.s32.totalorder %s14, 0
    %p49 = por %p47, %p48
    %p50 = scmp.ne.s32.totalorder %s36, %s37
    %p51 = scmp.eq.s32.totalorder %s15, 1
    %p52 = por %p50, %p51
    %p54 = scmp.ne.s32.totalorder %s37, %s53
    %p55 = scmp.eq.s32.totalorder %s15, 0
    %p56 = por %p54, %p55
    %s58 = sadd.s32 %s57, 1
    %p61 = scmp.eq.s32.totalorder %s9, 1
    %p62 = scmp.ne.s32.totalorder %s57, %s59
    %p63 = scmp.eq.s32.totalorder %s9, 0
    %p64 = por %p62, %p63
    %p65 = scmp.ne.s32.totalorder %s57, %s59
    %p66 = scmp.eq.s32.totalorder %s14, 1
    %p67 = por %p65, %p66
    %p68 = scmp.ne.s32.totalorder %s59, %s60
    %p69 = scmp.eq.s32.totalorder %s14, 0
    %p70 = por %p68, %p69
    %p71 = scmp.ne.s32.totalorder %s59, %s60
    %p72 = scmp.eq.s32.totalorder %s15, 1
    %p73 = por %p71, %p72
    %p75 = scmp.ne.s32.totalorder %s60, %s74
    %p76 = scmp.eq.s32.totalorder %s15, 0
    %p77 = por %p75, %p76
    %s79 = sadd.s32 %s78, 1
    %p82 = scmp.eq.s32.totalorder %s9, 1
    %p83 = scmp.ne.s32.totalorder %s78, %s80
    %p84 = scmp.eq.s32.totalorder %s9, 0
    %p85 = por %p83, %p84
    %p86 = scmp.ne.s32.totalorder %s78, %s80
    %p87 = scmp.eq.s32.totalorder %s14, 1
    %p88 = por %p86, %p87
    %p89 = scmp.ne.s32.totalorder %s80, %s81
    %p90 = scmp.eq.s32.totalorder %s14, 0
    %p91 = por %p89, %p90
    %p92 = scmp.ne.s32.totalorder %s80, %s81
    %p93 = scmp.eq.s32.totalorder %s15, 1
    %p94 = por %p92, %p93
    %p96 = scmp.ne.s32.totalorder %s81, %s95
    %p97 = scmp.eq.s32.totalorder %s15, 0
    %p98 = por %p96, %p97
    %s99 = ssub.s32 %s16, %s28
    %s100 = ssub.s32 %s17, %s24
    %s101 = sor.u32 %s99, %s100
    %p102 = scmp.eq.s32.totalorder %s101, 0
    %s104 = sadd.s32 %s103, 1
    %s105 = scalar_select %p102, %s103, %s104
    %p108 = pneg %p102
    %p109 = scmp.eq.s32.totalorder %s9, 1
    %p110 = por %p108, %p109
    %p111 = scmp.ne.s32.totalorder %s103, %s106
    %p112 = scmp.eq.s32.totalorder %s9, 0
    %p113 = por %p111, %p112
    %p114 = scmp.ne.s32.totalorder %s103, %s106
    %p115 = scmp.eq.s32.totalorder %s14, 1
    %p116 = por %p114, %p115
    %p117 = scmp.ne.s32.totalorder %s106, %s107
    %p118 = scmp.eq.s32.totalorder %s14, 0
    %p119 = por %p117, %p118
    %p120 = scmp.ne.s32.totalorder %s106, %s107
    %p121 = scmp.eq.s32.totalorder %s15, 1
    %p122 = por %p120, %p121
    %p124 = scmp.ne.s32.totalorder %s107, %s123
    %p125 = scmp.eq.s32.totalorder %s15, 0
    %p126 = por %p124, %p125
    %p127 = scmp.le.s32.totalorder 1, %s9
    %p128 = scmp.lt.s32.totalorder %s9, 3
    %p129 = pnand %p127, %p128
    %p130 = pneg %p129
    // Predicated region
    $region9: #{tpu_custom_call.1} parent=5 // pred_check
      _
    $region10: #{tpu_custom_call.1} parent=5 // pred_check_branch
      %132 = sbr.rel (%p129) target = $region12
    $region11: #{tpu_custom_call.1} parent=5 // pred_region
      %s133 = ssub.s32 %s9, 1
      // Predicated region
      $region13: #{tpu_custom_call.1} parent=11 // pred_check
        %p134 = pneg %p70
      $region14: #{tpu_custom_call.1} parent=11 // pred_check_branch
        %136 = sbr.rel (%p134) target = $region16
      $region15: #{tpu_custom_call.1} parent=11 // pred_region
        _
      $region16: #{tpu_custom_call.1} parent=11 // pred_fallthru
        _
      // Predicated region
      $region17: #{tpu_custom_call.1} parent=11 // pred_check
        %p137 = pneg %p91
      $region18: #{tpu_custom_call.1} parent=11 // pred_check_branch
        %139 = sbr.rel (%p137) target = $region20
      $region19: #{tpu_custom_call.1} parent=11 // pred_region
        _
      $region20: #{tpu_custom_call.1} parent=11 // pred_fallthru
        _
    $region12: #{tpu_custom_call.1} parent=5 // pred_fallthru
      _
    %p140 = scmp.lt.s32.totalorder %s9, 2
    // Predicated region
    $region21: #{tpu_custom_call.1} parent=5 // pred_check
      %p141 = pneg %p140
    $region22: #{tpu_custom_call.1} parent=5 // pred_check_branch
      %143 = sbr.rel (%p141) target = $region24
    $region23: #{tpu_custom_call.1} parent=5 // pred_region
      // Predicated region
      $region25: #{tpu_custom_call.1} parent=23 // pred_check
        %p144 = pneg %p43
      $region26: #{tpu_custom_call.1} parent=23 // pred_check_branch
        %146 = sbr.rel (%p144) target = $region28
      $region27: #{tpu_custom_call.1} parent=23 // pred_region
        %s147 = smul.u32 4, %s16
        %p148 = scmp.lt.s32.totalorder %s147, 7
        %s149 = scalar_select %p148, %s147, 7
        %p150 = scmp.lt.s32.totalorder %s17, 0
        %s151 = scalar_select %p150, %s17, 0
        %s152 = smul.addr %s149, 4
        %s153 = sadd.s32 %s151, %s152
        %s154 = smul.addr %s153, 8
        %s155 = scalar_lea.vmem %s0, %s154
        %s156 = smul.u32 4, %s16
      $region28: #{tpu_custom_call.1} parent=23 // pred_fallthru
        _
    $region24: #{tpu_custom_call.1} parent=5 // pred_fallthru
      _
    %p157 = scmp.le.s32.totalorder 1, %s9
    %p158 = scmp.lt.s32.totalorder %s9, 3
    %p159 = pnand %p157, %p158
    %p160 = pneg %p159
    // Predicated region
    $region29: #{tpu_custom_call.1} parent=5 // pred_check
      _
    $region30: #{tpu_custom_call.1} parent=5 // pred_check_branch
      %162 = sbr.rel (%p159) target = $region32
    $region31: #{tpu_custom_call.1} parent=5 // pred_region
      %s163 = ssub.s32 %s9, 1
      %s164 = smul.u32 4, %s18
      %p165 = scmp.lt.s32.totalorder %s164, 7
      %s166 = scalar_select %p165, %s164, 7
      %p167 = scmp.lt.s32.totalorder %s19, 0
      %s168 = scalar_select %p167, %s19, 0
      %s169 = smul.addr %s166, 4
      %s170 = sadd.s32 %s168, %s169
      %s171 = smul.addr %s170, 8
      %s172 = scalar_lea.vmem %s0, %s171
      %p173 = pneg %p49
      %p174 = pneg %p46
      %p175 = pneg %p70
      %p176 = pneg %p67
      %p177 = pneg %p91
      %p178 = pneg %p88
      %p179 = pneg %p119
      %p180 = pneg %p116
      %s181 = smul.u32 4, %s18
      %p182 = scmp.lt.s32.totalorder %s181, 7
      %s183 = scalar_select %p182, %s181, 7
      %p184 = scmp.lt.s32.totalorder %s19, 0
      %s185 = scalar_select %p184, %s19, 0
      %s186 = smul.addr %s183, 4
      %s187 = sadd.s32 %s185, %s186
      %s188 = smul.addr %s187, 8
      %s189 = scalar_lea.vmem %s3, %s188
      %s190 = smul.u32 4, %s18
      %p191 = scmp.lt.s32.totalorder %s190, 7
      %s192 = scalar_select %p191, %s190, 7
      %p193 = scmp.lt.s32.totalorder %s19, 0
      %s194 = scalar_select %p193, %s19, 0
      %s195 = smul.addr %s192, 4
      %s196 = sadd.s32 %s194, %s195
      %s197 = smul.addr %s196, 8
      %s198 = scalar_lea.vmem %s0, %s197
      %s199 = smul.u32 4, %s18
      %s200 = smul.u32 4, %s18
      %p201 = scmp.lt.s32.totalorder %s200, 7
      %s202 = scalar_select %p201, %s200, 7
      %p203 = scmp.lt.s32.totalorder %s19, 0
      %s204 = scalar_select %p203, %s19, 0
      %s205 = smul.addr %s202, 4
      %s206 = sadd.s32 %s204, %s205
      %s207 = smul.addr %s206, 8
      %s208 = scalar_lea.vmem %s3, %s207
      %s209 = smul.u32 4, %s18
      %v210 = vld [vmem:[%s198] sm:$0xff]
      %v211 = vld [vmem:[%s198 + $0x8] sm:$0xff]
      %v212 = vld [vmem:[%s198 + $0x10] sm:$0xff]
      %v213 = vld [vmem:[%s198 + $0x18] sm:$0xff]
      %v214 = vld [vmem:[%s198 + $0x20] sm:$0xff]
      %v215 = vld [vmem:[%s198 + $0x28] sm:$0xff]
      %v216 = vld [vmem:[%s198 + $0x30] sm:$0xff]
      %v217 = vld [vmem:[%s198 + $0x38] sm:$0xff]
      %v218 = vld [vmem:[%s198 + $0x40] sm:$0xff]
      %v219 = vld [vmem:[%s198 + $0x48] sm:$0xff]
      %v220 = vld [vmem:[%s198 + $0x50] sm:$0xff]
      %v221 = vld [vmem:[%s198 + $0x58] sm:$0xff]
      %v222 = vld [vmem:[%s198 + $0x60] sm:$0xff]
      %v223 = vld [vmem:[%s198 + $0x68] sm:$0xff]
      %v224 = vld [vmem:[%s198 + $0x70] sm:$0xff]
      %v225 = vld [vmem:[%s198 + $0x78] sm:$0xff]
      %vm226 = vcmask 130048
      %v227 = vsel %vm226, %v210, 0.0
      %v228 = vsel %vm226, %v211, 0.0
      %v229 = vadd.f32 %v227, %v228
      %v230 = vsel %vm226, %v212, 0.0
      %v231 = vadd.f32 %v229, %v230
      %v232 = vsel %vm226, %v213, 0.0
      %v233 = vadd.f32 %v231, %v232
      %v234 = vrot.slane %v233, 4
      %v235 = vadd.f32 %v233, %v234
      %v236 = vrot.slane %v235, 2
      %v237 = vadd.f32 %v235, %v236
      %v238 = vrot.slane %v237, 1
      %v239 = vadd.f32 %v237, %v238
      %v240 = vsel %vm226, %v214, 0.0
      %v241 = vsel %vm226, %v215, 0.0
      %v242 = vadd.f32 %v240, %v241
      %v243 = vsel %vm226, %v216, 0.0
      %v244 = vadd.f32 %v242, %v243
      %v245 = vsel %vm226, %v217, 0.0
      %v246 = vadd.f32 %v244, %v245
      %v247 = vrot.slane %v246, 4
      %v248 = vadd.f32 %v246, %v247
      %v249 = vrot.slane %v248, 2
      %v250 = vadd.f32 %v248, %v249
      %v251 = vrot.slane %v250, 1
      %v252 = vadd.f32 %v250, %v251
      %v253 = vsel %vm226, %v218, 0.0
      %v254 = vsel %vm226, %v219, 0.0
      %v255 = vadd.f32 %v253, %v254
      %v256 = vsel %vm226, %v220, 0.0
      %v257 = vadd.f32 %v255, %v256
      %v258 = vsel %vm226, %v221, 0.0
      %v259 = vadd.f32 %v257, %v258
      %v260 = vrot.slane %v259, 4
      %v261 = vadd.f32 %v259, %v260
      %v262 = vrot.slane %v261, 2
      %v263 = vadd.f32 %v261, %v262
      %v264 = vrot.slane %v263, 1
      %v265 = vadd.f32 %v263, %v264
      %v266 = vsel %vm226, %v222, 0.0
      %v267 = vsel %vm226, %v223, 0.0
      %v268 = vadd.f32 %v266, %v267
      %v269 = vsel %vm226, %v224, 0.0
      %v270 = vadd.f32 %v268, %v269
      %v271 = vsel %vm226, %v225, 0.0
      %v272 = vadd.f32 %v270, %v271
      %v273 = vrot.slane %v272, 4
      %v274 = vadd.f32 %v272, %v273
      %v275 = vrot.slane %v274, 2
      %v276 = vadd.f32 %v274, %v275
      %v277 = vrot.slane %v276, 1
      %v278 = vadd.f32 %v276, %v277
      %v279 = vrcp.pop 32.0
      %v280 = vmul.f32 32.0, %v279
      %v281 = vsub.f32 1.0, %v280
      %v282 = vmul.f32 %v279, %v281
      %v283 = vadd.f32 %v279, %v282
      %vm284 = vweird.f32 %v279
      %v285 = vsel %vm284, %v279, %v283
      %v286 = vmul.f32 %v239, %v285
      %v287 = vmul.f32 %v252, %v285
      %v288 = vmul.f32 %v265, %v285
      %v289 = vmul.f32 %v278, %v285
      %v290 = vsub.f32 %v210, %v286
      %v291 = vsub.f32 %v211, %v286
      %v292 = vsub.f32 %v212, %v286
      %v293 = vsub.f32 %v213, %v286
      %v294 = vsub.f32 %v214, %v287
      %v295 = vsub.f32 %v215, %v287
      %v296 = vsub.f32 %v216, %v287
      %v297 = vsub.f32 %v217, %v287
      %v298 = vsub.f32 %v218, %v288
      %v299 = vsub.f32 %v219, %v288
      %v300 = vsub.f32 %v220, %v288
      %v301 = vsub.f32 %v221, %v288
      %v302 = vsub.f32 %v222, %v289
      %v303 = vsub.f32 %v223, %v289
      %v304 = vsub.f32 %v224, %v289
      %v305 = vsub.f32 %v225, %v289
      %v306 = vmul.f32 %v290, %v290
      %v307 = vmul.f32 %v291, %v291
      %v308 = vmul.f32 %v292, %v292
      %v309 = vmul.f32 %v293, %v293
      %v310 = vmul.f32 %v294, %v294
      %v311 = vmul.f32 %v295, %v295
      %v312 = vmul.f32 %v296, %v296
      %v313 = vmul.f32 %v297, %v297
      %v314 = vmul.f32 %v298, %v298
      %v315 = vmul.f32 %v299, %v299
      %v316 = vmul.f32 %v300, %v300
      %v317 = vmul.f32 %v301, %v301
      %v318 = vmul.f32 %v302, %v302
      %v319 = vmul.f32 %v303, %v303
      %v320 = vmul.f32 %v304, %v304
      %v321 = vmul.f32 %v305, %v305
      %v322 = vsel %vm226, %v306, 0.0
      %v323 = vsel %vm226, %v307, 0.0
      %v324 = vadd.f32 %v322, %v323
      %v325 = vsel %vm226, %v308, 0.0
      %v326 = vadd.f32 %v324, %v325
      %v327 = vsel %vm226, %v309, 0.0
      %v328 = vadd.f32 %v326, %v327
      %v329 = vrot.slane %v328, 4
      %v330 = vadd.f32 %v328, %v329
      %v331 = vrot.slane %v330, 2
      %v332 = vadd.f32 %v330, %v331
      %v333 = vrot.slane %v332, 1
      %v334 = vadd.f32 %v332, %v333
      %v335 = vsel %vm226, %v310, 0.0
      %v336 = vsel %vm226, %v311, 0.0
      %v337 = vadd.f32 %v335, %v336
      %v338 = vsel %vm226, %v312, 0.0
      %v339 = vadd.f32 %v337, %v338
      %v340 = vsel %vm226, %v313, 0.0
      %v341 = vadd.f32 %v339, %v340
      %v342 = vrot.slane %v341, 4
      %v343 = vadd.f32 %v341, %v342
      %v344 = vrot.slane %v343, 2
      %v345 = vadd.f32 %v343, %v344
      %v346 = vrot.slane %v345, 1
      %v347 = vadd.f32 %v345, %v346
      %v348 = vsel %vm226, %v314, 0.0
      %v349 = vsel %vm226, %v315, 0.0
      %v350 = vadd.f32 %v348, %v349
      %v351 = vsel %vm226, %v316, 0.0
      %v352 = vadd.f32 %v350, %v351
      %v353 = vsel %vm226, %v317, 0.0
      %v354 = vadd.f32 %v352, %v353
      %v355 = vrot.slane %v354, 4
      %v356 = vadd.f32 %v354, %v355
      %v357 = vrot.slane %v356, 2
      %v358 = vadd.f32 %v356, %v357
      %v359 = vrot.slane %v358, 1
      %v360 = vadd.f32 %v358, %v359
      %v361 = vsel %vm226, %v318, 0.0
      %v362 = vsel %vm226, %v319, 0.0
      %v363 = vadd.f32 %v361, %v362
      %v364 = vsel %vm226, %v320, 0.0
      %v365 = vadd.f32 %v363, %v364
      %v366 = vsel %vm226, %v321, 0.0
      %v367 = vadd.f32 %v365, %v366
      %v368 = vrot.slane %v367, 4
      %v369 = vadd.f32 %v367, %v368
      %v370 = vrot.slane %v369, 2
      %v371 = vadd.f32 %v369, %v370
      %v372 = vrot.slane %v371, 1
      %v373 = vadd.f32 %v371, %v372
      %v374 = vmul.f32 %v334, %v285
      %v375 = vmul.f32 %v347, %v285
      %v376 = vmul.f32 %v360, %v285
      %v377 = vmul.f32 %v373, %v285
      %v378 = vadd.f32 %v374, 1e-05
      %v379 = vadd.f32 %v375, 1e-05
      %v380 = vadd.f32 %v376, 1e-05
      %v381 = vadd.f32 %v377, 1e-05
      %v382 = vrsqrt.pop %v378
      %v383 = vmul.f32 %v382, %v378
      %v384 = vmul.f32 %v383, %v382
      %v385 = vmul.f32 0.5, %v384
      %v386 = vsub.f32 1.5, %v385
      %v387 = vmul.f32 %v382, %v386
      %vm388 = vweird.f32 %v378
      %vm389 = vweird.f32 %v382
      %vm390 = vmor %vm388, %vm389
      %v391 = vsel %vm390, %v382, %v387
      %v392 = vrsqrt.pop %v379
      %v393 = vmul.f32 %v392, %v379
      %v394 = vmul.f32 %v393, %v392
      %v395 = vmul.f32 0.5, %v394
      %v396 = vsub.f32 1.5, %v395
      %v397 = vmul.f32 %v392, %v396
      %vm398 = vweird.f32 %v379
      %vm399 = vweird.f32 %v392
      %vm400 = vmor %vm398, %vm399
      %v401 = vsel %vm400, %v392, %v397
      %v402 = vrsqrt.pop %v380
      %v403 = vmul.f32 %v402, %v380
      %v404 = vmul.f32 %v403, %v402
      %v405 = vmul.f32 0.5, %v404
      %v406 = vsub.f32 1.5, %v405
      %v407 = vmul.f32 %v402, %v406
      %vm408 = vweird.f32 %v380
      %vm409 = vweird.f32 %v402
      %vm410 = vmor %vm408, %vm409
      %v411 = vsel %vm410, %v402, %v407
      %v412 = vrsqrt.pop %v381
      %v413 = vmul.f32 %v412, %v381
      %v414 = vmul.f32 %v413, %v412
      %v415 = vmul.f32 0.5, %v414
      %v416 = vsub.f32 1.5, %v415
      %v417 = vmul.f32 %v412, %v416
      %vm418 = vweird.f32 %v381
      %vm419 = vweird.f32 %v412
      %vm420 = vmor %vm418, %vm419
      %v421 = vsel %vm420, %v412, %v417
      %v422 = vld [vmem:[%s1] sm:$0xff]
      %v423 = vld [vmem:[%s1 + $0x8] sm:$0xff]
      %v424 = vld [vmem:[%s1 + $0x10] sm:$0xff]
      %v425 = vld [vmem:[%s1 + $0x18] sm:$0xff]
      %v426 = vld [vmem:[%s2] sm:$0xff]
      %v427 = vld [vmem:[%s2 + $0x8] sm:$0xff]
      %v428 = vld [vmem:[%s2 + $0x10] sm:$0xff]
      %v429 = vld [vmem:[%s2 + $0x18] sm:$0xff]
      %v430 = vmul.f32 %v290, %v391
      %v431 = vmul.f32 %v291, %v391
      %v432 = vmul.f32 %v292, %v391
      %v433 = vmul.f32 %v293, %v391
      %v434 = vmul.f32 %v294, %v401
      %v435 = vmul.f32 %v295, %v401
      %v436 = vmul.f32 %v296, %v401
      %v437 = vmul.f32 %v297, %v401
      %v438 = vmul.f32 %v298, %v411
      %v439 = vmul.f32 %v299, %v411
      %v440 = vmul.f32 %v300, %v411
      %v441 = vmul.f32 %v301, %v411
      %v442 = vmul.f32 %v302, %v421
      %v443 = vmul.f32 %v303, %v421
      %v444 = vmul.f32 %v304, %v421
      %v445 = vmul.f32 %v305, %v421
      %447 = vset.pattern.permute.xlu0 0
      %448 = vperm.xlu0 %447, %v422
      %v449 = vpop.permute.xlu0 %448
      %452 = vset.pattern.permute.xlu0 0
      %453 = vperm.xlu0 %452, %v423
      %v454 = vpop.permute.xlu0 %453
      %457 = vset.pattern.permute.xlu0 0
      %458 = vperm.xlu0 %457, %v424
      %v459 = vpop.permute.xlu0 %458
      %462 = vset.pattern.permute.xlu0 0
      %463 = vperm.xlu0 %462, %v425
      %v464 = vpop.permute.xlu0 %463
      %v466 = vmul.f32 %v430, %v449
      %v467 = vmul.f32 %v431, %v454
      %v468 = vmul.f32 %v432, %v459
      %v469 = vmul.f32 %v433, %v464
      %v470 = vmul.f32 %v434, %v449
      %v471 = vmul.f32 %v435, %v454
      %v472 = vmul.f32 %v436, %v459
      %v473 = vmul.f32 %v437, %v464
      %v474 = vmul.f32 %v438, %v449
      %v475 = vmul.f32 %v439, %v454
      %v476 = vmul.f32 %v440, %v459
      %v477 = vmul.f32 %v441, %v464
      %v478 = vmul.f32 %v442, %v449
      %v479 = vmul.f32 %v443, %v454
      %v480 = vmul.f32 %v444, %v459
      %v481 = vmul.f32 %v445, %v464
      %483 = vset.pattern.permute.xlu0 0
      %484 = vperm.xlu0 %483, %v426
      %v485 = vpop.permute.xlu0 %484
      %488 = vset.pattern.permute.xlu0 0
      %489 = vperm.xlu0 %488, %v427
      %v490 = vpop.permute.xlu0 %489
      %493 = vset.pattern.permute.xlu0 0
      %494 = vperm.xlu0 %493, %v428
      %v495 = vpop.permute.xlu0 %494
      %498 = vset.pattern.permute.xlu0 0
      %499 = vperm.xlu0 %498, %v429
      %v500 = vpop.permute.xlu0 %499
      %v502 = vadd.f32 %v466, %v485
      %v503 = vadd.f32 %v467, %v490
      %v504 = vadd.f32 %v468, %v495
      %v505 = vadd.f32 %v469, %v500
      %v506 = vadd.f32 %v470, %v485
      %v507 = vadd.f32 %v471, %v490
      %v508 = vadd.f32 %v472, %v495
      %v509 = vadd.f32 %v473, %v500
      %v510 = vadd.f32 %v474, %v485
      %v511 = vadd.f32 %v475, %v490
      %v512 = vadd.f32 %v476, %v495
      %v513 = vadd.f32 %v477, %v500
      %v514 = vadd.f32 %v478, %v485
      %v515 = vadd.f32 %v479, %v490
      %v516 = vadd.f32 %v480, %v495
      %v517 = vadd.f32 %v481, %v500
      %518 = vst.msk [vmem:[%s208] sm:$0xff] %vm226, %v502
      %519 = vst.msk [vmem:[%s208 + $0x8] sm:$0xff] %vm226, %v503
      %520 = vst.msk [vmem:[%s208 + $0x10] sm:$0xff] %vm226, %v504
      %521 = vst.msk [vmem:[%s208 + $0x18] sm:$0xff] %vm226, %v505
      %522 = vst.msk [vmem:[%s208 + $0x20] sm:$0xff] %vm226, %v506
      %523 = vst.msk [vmem:[%s208 + $0x28] sm:$0xff] %vm226, %v507
      %524 = vst.msk [vmem:[%s208 + $0x30] sm:$0xff] %vm226, %v508
      %525 = vst.msk [vmem:[%s208 + $0x38] sm:$0xff] %vm226, %v509
      %526 = vst.msk [vmem:[%s208 + $0x40] sm:$0xff] %vm226, %v510
      %527 = vst.msk [vmem:[%s208 + $0x48] sm:$0xff] %vm226, %v511
      %528 = vst.msk [vmem:[%s208 + $0x50] sm:$0xff] %vm226, %v512
      %529 = vst.msk [vmem:[%s208 + $0x58] sm:$0xff] %vm226, %v513
      %530 = vst.msk [vmem:[%s208 + $0x60] sm:$0xff] %vm226, %v514
      %531 = vst.msk [vmem:[%s208 + $0x68] sm:$0xff] %vm226, %v515
      %532 = vst.msk [vmem:[%s208 + $0x70] sm:$0xff] %vm226, %v516
      %533 = vst.msk [vmem:[%s208 + $0x78] sm:$0xff] %vm226, %v517
      %s534 = smul.u32 4, %s18
      %p535 = scmp.lt.s32.totalorder %s534, 7
      %s536 = scalar_select %p535, %s534, 7
      %p537 = scmp.lt.s32.totalorder %s19, 0
      %s538 = scalar_select %p537, %s19, 0
      %s539 = smul.addr %s536, 4
      %s540 = sadd.s32 %s538, %s539
      %s541 = smul.addr %s540, 8
      %s542 = scalar_lea.vmem %s3, %s541
      // Predicated region
      $region33: #{tpu_custom_call.1} parent=31 // pred_check
        %p543 = pneg %p116
      $region34: #{tpu_custom_call.1} parent=31 // pred_check_branch
        %545 = sbr.rel (%p543) target = $region36
      $region35: #{tpu_custom_call.1} parent=31 // pred_region
        %s546 = smul.u32 4, %s18
      $region36: #{tpu_custom_call.1} parent=31 // pred_fallthru
        _
    $region32: #{tpu_custom_call.1} parent=5 // pred_fallthru
      _
    %p547 = scmp.le.s32.totalorder 2, %s9
    // Predicated region
    $region37: #{tpu_custom_call.1} parent=5 // pred_check
      %p548 = pneg %p547
    $region38: #{tpu_custom_call.1} parent=5 // pred_check_branch
      %550 = sbr.rel (%p548) target = $region40
    $region39: #{tpu_custom_call.1} parent=5 // pred_region
      %s551 = ssub.s32 %s9, 2
      // Predicated region
      $region41: #{tpu_custom_call.1} parent=39 // pred_check
        %p552 = pneg %p122
      $region42: #{tpu_custom_call.1} parent=39 // pred_check_branch
        %554 = sbr.rel (%p552) target = $region44
      $region43: #{tpu_custom_call.1} parent=39 // pred_region
        %s555 = smul.u32 4, %s20
        %p556 = scmp.lt.s32.totalorder %s555, 7
        %s557 = scalar_select %p556, %s555, 7
        %p558 = scmp.lt.s32.totalorder %s21, 0
        %s559 = scalar_select %p558, %s21, 0
        %s560 = smul.addr %s557, 4
        %s561 = sadd.s32 %s559, %s560
        %s562 = smul.addr %s561, 8
        %s563 = scalar_lea.vmem %s3, %s562
      $region44: #{tpu_custom_call.1} parent=39 // pred_fallthru
        _
    $region40: #{tpu_custom_call.1} parent=5 // pred_fallthru
      _
  $region6: #{tpu_custom_call.1} parent=0 // loop_footer
    %s13 = sadd.s32 1, %s9
  $region7: #{tpu_custom_call.1} parent=0 // loop_footer_branch
    %8 = sbr.rel target = $region3
  $region8: #{tpu_custom_call.1} parent=0 // loop_exit
    _

</llo_original>
